<compile_context>
chip_gen: v5e
topology: v5e:2x2
jax: 0.10.0
libtpu: 0.0.40
codegen_flags: <defaults>
</compile_context>

<pallas_src>
import functools

import jax
import jax.numpy as jnp
from jax.experimental import pallas as pl
from jax.experimental.pallas import tpu as pltpu


def _round_up(x, m):
    return (x + m - 1) // m * m


# ---------------------------------------------------------------------------
# Kernels
# ---------------------------------------------------------------------------
def _classifier_kernel_single(x_ref, w_ref, b_ref, o_ref):
    # Whole reduction axis in one tile: single MXU call + bias add + store.
    # x_ref: (TB, Hp)  w_ref: (Hp, Lp)  b_ref: (1, Lp)  o_ref: (TB, Lp)
    acc = jnp.dot(x_ref[...], w_ref[...], preferred_element_type=jnp.float32)
    o_ref[...] = (acc + b_ref[...].astype(jnp.float32)).astype(o_ref.dtype)


def _classifier_kernel_tiled(x_ref, w_ref, b_ref, o_ref, acc_ref):
    # K-tiled path for large hidden sizes.
    # x_ref: (TB, TK)  w_ref: (TK, Lp)  b_ref: (1, Lp)
    # o_ref: (TB, Lp)  acc_ref: (TB, Lp) f32, resident across the K axis.
    k = pl.program_id(1)

    @pl.when(k == 0)
    def _():
        # Fold the bias into the accumulator init (no separate VPU add pass).
        acc_ref[...] = jnp.broadcast_to(
            b_ref[...].astype(jnp.float32), acc_ref.shape)

    acc_ref[...] += jnp.dot(x_ref[...], w_ref[...],
                            preferred_element_type=jnp.float32)

    @pl.when(k == pl.num_programs(1) - 1)
    def _():
        o_ref[...] = acc_ref[...].astype(o_ref.dtype)


# ---------------------------------------------------------------------------
# One-time parameter prep (outside the hot path)
# ---------------------------------------------------------------------------
def prep_classifier_params(weight, bias, *, lane=128):
    """weight: (num_labels, hidden) PyTorch nn.Linear layout; bias: (num_labels,).

    Returns (w_t_pad, b_pad): (hidden_pad, L_pad) and (1, L_pad), zero-padded
    so the kernel output last dim is a multiple of 128 (lane-dense stores).
    """
    L, H = weight.shape
    Lp = _round_up(L, lane)
    Hp = _round_up(H, lane)
    w_t = jnp.transpose(weight, (1, 0))                  # (H, L)
    w_t = jnp.pad(w_t, ((0, Hp - H), (0, Lp - L)))       # (Hp, Lp)
    b = jnp.pad(bias, (0, Lp - L)).reshape(1, Lp)        # (1, Lp)
    return w_t, b


# ---------------------------------------------------------------------------
# Forward wrapper:  logits = dropout(pooled) @ W^T + b   (dropout = identity)
# ---------------------------------------------------------------------------
@functools.partial(jax.jit, static_argnames=("num_labels", "tb", "tk"))
def bert_classifier_head(pooled, w_t_pad, b_pad, num_labels, *, tb=256, tk=512):
    B, H = pooled.shape
    Hp, Lp = w_t_pad.shape

    # Batch tiling (sublane-aligned, multiple of 8).
    Bp = _round_up(B, 8)
    TB = Bp if Bp <= tb else _round_up(tb, 8)
    Bp = _round_up(Bp, TB)

    x = pooled
    if (Bp, Hp) != (B, H):
        x = jnp.pad(pooled, ((0, Bp - B), (0, Hp - H)))

    flops = 2 * Bp * Hp * Lp
    bytes_accessed = 4 * (Bp * Hp + Hp * Lp + Lp + Bp * Lp)
    cost = pl.CostEstimate(flops=flops, transcendentals=0,
                           bytes_accessed=bytes_accessed)

    if Hp <= tk:
        # Entire reduction axis in one tile -> no accumulator round trip.
        out = pl.pallas_call(
            _classifier_kernel_single,
            out_shape=jax.ShapeDtypeStruct((Bp, Lp), pooled.dtype),
            grid_spec=pltpu.PrefetchScalarGridSpec(
                num_scalar_prefetch=0,
                grid=(Bp // TB,),
                in_specs=[
                    pl.BlockSpec((TB, Hp), lambda i: (i, 0)),   # pooled
                    pl.BlockSpec((Hp, Lp), lambda i: (0, 0)),   # weight^T
                    pl.BlockSpec((1, Lp), lambda i: (0, 0)),    # bias
                ],
                out_specs=pl.BlockSpec((TB, Lp), lambda i: (i, 0)),
            ),
            compiler_params=pltpu.CompilerParams(
                dimension_semantics=("parallel",)),
            cost_estimate=cost,
        )(x, w_t_pad, b_pad)
    else:
        # Largest multiple of 128 dividing Hp, capped at tk.
        TK = 128
        for cand in range(128, tk + 1, 128):
            if Hp % cand == 0:
                TK = cand

        out = pl.pallas_call(
            _classifier_kernel_tiled,
            out_shape=jax.ShapeDtypeStruct((Bp, Lp), pooled.dtype),
            grid_spec=pltpu.PrefetchScalarGridSpec(
                num_scalar_prefetch=0,
                grid=(Bp // TB, Hp // TK),
                in_specs=[
                    pl.BlockSpec((TB, TK), lambda i, k: (i, k)),   # pooled
                    pl.BlockSpec((TK, Lp), lambda i, k: (k, 0)),   # weight^T
                    pl.BlockSpec((1, Lp), lambda i, k: (0, 0)),    # bias
                ],
                out_specs=pl.BlockSpec((TB, Lp), lambda i, k: (i, 0)),
                scratch_shapes=[pltpu.VMEM((TB, Lp), jnp.float32)],
            ),
            compiler_params=pltpu.CompilerParams(
                dimension_semantics=("parallel", "arbitrary")),
            cost_estimate=cost,
        )(x, w_t_pad, b_pad)

    # Slice away batch / label padding.
    return out[:B, :num_labels]


if __name__ == "__main__":
    key = jax.random.PRNGKey(0)
    k_pool, k_w, k_b = jax.random.split(key, 3)

    # Small shapes consistent with the module: batch=8, hidden=128, num_labels=4.
    B, H, L = 8, 128, 4

    # TODO(synk): `self.bert` is an opaque fx-traced GraphModule supplied at
    # construction; its internals are not part of this module, so the kernel
    # consumes its pooler_output (B, hidden) directly (simulated here).
    pooled = jax.random.normal(k_pool, (B, H), jnp.float32)

    # Deterministic classifier params (nn.Linear(hidden, num_labels) layout).
    bound = 1.0 / (H ** 0.5)
    weight = jax.random.uniform(k_w, (L, H), jnp.float32, -bound, bound)
    bias = jax.random.uniform(k_b, (L,), jnp.float32, -bound, bound)

    # Param prep happens once, outside the hot path.
    w_t_pad, b_pad = prep_classifier_params(weight, bias)

    # Forward: dropout (identity in eval) + classifier -> logits.
    logits = bert_classifier_head(pooled, w_t_pad, b_pad, L)
    jax.block_until_ready(logits)

    # Pure-JAX reference for the classifier head.
    ref = pooled @ weight.T + bias
    assert logits.shape == (B, L)
    assert jnp.allclose(logits, ref, atol=1e-5, rtol=1e-5), "mismatch vs reference"

    print("KERNEL_OK")
</pallas_src>

<mosaic_0001>
module attributes {stable_mosaic.version = 11 : i64} {
  func.func @_classifier_kernel_single(%arg0: i32, %arg1: memref<8x128xf32, #tpu.memory_space<vmem>>, %arg2: memref<128x128xf32, #tpu.memory_space<vmem>>, %arg3: memref<1x128xf32, #tpu.memory_space<vmem>>, %arg4: memref<8x128xf32, #tpu.memory_space<vmem>>) attributes {dimension_semantics = [#tpu.dimension_semantics<parallel>], iteration_bounds = array<i64: 1>, scalar_prefetch = 0 : i64, scratch_operands = 0 : i64, tpu.core_type = #tpu.core_type<tc>, window_params = [{transform_indices = @transform_0, window_bounds = array<i64: 8, 128>}, {pipeline_mode = #tpu.pipeline_mode<synchronous>, transform_indices = @transform_1, window_bounds = array<i64: 128, 128>}, {pipeline_mode = #tpu.pipeline_mode<synchronous>, transform_indices = @transform_2, window_bounds = array<i64: 1, 128>}, {transform_indices = @transform_3, window_bounds = array<i64: 8, 128>}]} {
    %c0 = arith.constant 0 : index
    %c0_0 = arith.constant 0 : index
    %0 = vector.load %arg1[%c0, %c0_0] : memref<8x128xf32, #tpu.memory_space<vmem>>, vector<8x128xf32>
    %c0_1 = arith.constant 0 : index
    %c0_2 = arith.constant 0 : index
    %1 = vector.load %arg2[%c0_1, %c0_2] : memref<128x128xf32, #tpu.memory_space<vmem>>, vector<128x128xf32>
    %cst = arith.constant dense<0.000000e+00> : vector<8x128xf32>
    %2 = tpu.matmul %0, %1, %cst {dimension_numbers = #tpu.dot_dimension_numbers<[1], [0], [0], [1], [0, 0, 1, 1], [], []>} : vector<8x128xf32>, vector<128x128xf32>, vector<8x128xf32> -> vector<8x128xf32>
    %c0_3 = arith.constant 0 : index
    %c0_4 = arith.constant 0 : index
    %3 = vector.load %arg3[%c0_3, %c0_4] : memref<1x128xf32, #tpu.memory_space<vmem>>, vector<1x128xf32>
    %4 = vector.broadcast %3 : vector<1x128xf32> to vector<8x128xf32>
    %5 = arith.addf %2, %4 : vector<8x128xf32>
    %c0_5 = arith.constant 0 : index
    %c0_6 = arith.constant 0 : index
    %6 = vector.load %arg4[%c0_5, %c0_6] : memref<8x128xf32, #tpu.memory_space<vmem>>, vector<8x128xf32>
    tpu.vector_store %arg4[%c0_5, %c0_6], %5 {strides = array<i32>} : memref<8x128xf32, #tpu.memory_space<vmem>>, vector<8x128xf32>,
    return
  }
  func.func @transform_0(%arg0: i32) -> (i32, i32) {
    %c0_i32 = arith.constant 0 : i32
    %c0_i32_0 = arith.constant 0 : i32
    return %arg0, %c0_i32 : i32, i32
  }
  func.func @transform_1(%arg0: i32) -> (i32, i32) {
    %c0_i32 = arith.constant 0 : i32
    %c0_i32_0 = arith.constant 0 : i32
    %c0_i32_1 = arith.constant 0 : i32
    return %c0_i32, %c0_i32_0 : i32, i32
  }
  func.func @transform_2(%arg0: i32) -> (i32, i32) {
    %c0_i32 = arith.constant 0 : i32
    %c0_i32_0 = arith.constant 0 : i32
    %c0_i32_1 = arith.constant 0 : i32
    return %c0_i32, %c0_i32_0 : i32, i32
  }
  func.func @transform_3(%arg0: i32) -> (i32, i32) {
    %c0_i32 = arith.constant 0 : i32
    %c0_i32_0 = arith.constant 0 : i32
    return %arg0, %c0_i32 : i32, i32
  }
}

</mosaic_0001>

<llo_original>
// kernel: bert_classifier_head.1
$region0: #{bert_classifier_head.1}
  #allocation0 [shape = 'u32[]', space=smem, size = 0x4, offset = 0x4, fixed_abs, tag = 'smem constant byte address 0x4 - core index']
  #allocation1 [shape = 'u32[72,128]{1,0:T(1,128)}', space=vmem, size = 0x9000, scoped, tag = 'internal scratch']
  %s0 = inlined_call_operand.hbm [shape: f32[8,128], index: 0, kind: input, shape index: {}]
  %s1 = inlined_call_operand.hbm [shape: f32[128,128], index: 1, kind: input, shape index: {}]
  %s2 = inlined_call_operand.vmem [shape: f32[1,128], index: 2, kind: input, shape index: {}]
  %s3 = inlined_call_operand.vmem [shape: f32[8,128], index: 3, kind: output, shape index: {}]
  %s4 = sld [smem:[#allocation0]]
  $region30: #{bert_classifier_head.1} parent=0
    _
  %s6 = ssub.s32 1, %s4
  %s7 = scalar_select 0, %s6, %s4
  $region1: #{bert_classifier_head.1} parent=0
    #allocation2 [shape = 'u8[4096]{0}', space=vmem, size = 0x1000, scoped, tag = 'input window, operand 0, single buffered']
    #allocation3 [shape = 's32[1]{0}', space=sflag, size = 0x4, scoped, tag = 'scoped memory for bert_classifier_head.1']
    #allocation4 [shape = 'u8[65536]{0}', space=vmem, size = 0x10000, scoped, tag = 'input window, operand 1, single buffered']
    #allocation5 [shape = 's32[1]{0}', space=sflag, size = 0x4, scoped, tag = 'scoped memory for bert_classifier_head.1']
    %8 = vsyncpa [#allocation3], 0
    %9 = vsyncpa [#allocation5], 0
    // Predicated region
    $region2: #{bert_classifier_head.1} parent=1 // pred_check
      _
    $region3: #{bert_classifier_head.1} parent=1 // pred_check_branch
      %11 = sbr.rel (0) target = $region5
    $region4: #{bert_classifier_head.1} parent=1 // pred_region
      %13 = vsyncadd [#allocation3], 0
      %s15 = sshll.u32 %s0, 4
      %s16 = int_to_ptr.hbm [resolvable:$true] %s15
      %s17 = sshll.u32 [#allocation2], 4
      %s18 = int_to_ptr.vmem [resolvable:$true] %s17
      %20 = dma.hbm_to_vmem [thread:$0]  %s16, 128, %s18, [#allocation3]
    $region5: #{bert_classifier_head.1} parent=1 // pred_fallthru
      _
    // Predicated region
    $region6: #{bert_classifier_head.1} parent=1 // pred_check
      _
    $region7: #{bert_classifier_head.1} parent=1 // pred_check_branch
      %22 = sbr.rel (0) target = $region9
    $region8: #{bert_classifier_head.1} parent=1 // pred_region
      %24 = vsyncadd [#allocation5], 0
      %s25 = sshll.u32 %s1, 4
      %s26 = int_to_ptr.hbm [resolvable:$true] %s25
      %s27 = sshll.u32 [#allocation4], 4
      %s28 = int_to_ptr.vmem [resolvable:$true] %s27
      %33 = dma.hbm_to_vmem [thread:$0]  %s26, 2048, %s28, [#allocation5], 128, 128, 8
    $region9: #{bert_classifier_head.1} parent=1 // pred_fallthru
      _
    // Predicated region
    $region10: #{bert_classifier_head.1} parent=1 // pred_check
      _
    $region11: #{bert_classifier_head.1} parent=1 // pred_check_branch
      %35 = sbr.rel (0) target = $region13
    $region12: #{bert_classifier_head.1} parent=1 // pred_region
      _
    $region13: #{bert_classifier_head.1} parent=1 // pred_fallthru
      _
    // Predicated region
    $region14: #{bert_classifier_head.1} parent=1 // pred_check
      _
    $region15: #{bert_classifier_head.1} parent=1 // pred_check_branch
      %37 = sbr.rel (0) target = $region17
    $region16: #{bert_classifier_head.1} parent=1 // pred_region
      %39 = dma.done [#allocation3], 128
    $region17: #{bert_classifier_head.1} parent=1 // pred_fallthru
      _
    // Predicated region
    $region18: #{bert_classifier_head.1} parent=1 // pred_check
      _
    $region19: #{bert_classifier_head.1} parent=1 // pred_check_branch
      %41 = sbr.rel (0) target = $region21
    $region20: #{bert_classifier_head.1} parent=1 // pred_region
      %43 = dma.done [#allocation5], 2048
    $region21: #{bert_classifier_head.1} parent=1 // pred_fallthru
      _
    %v44 = vld [vmem:[#allocation2] sm:$0xff]
    %v45 = vld [vmem:[#allocation4] sm:$0xff]
    %v46 = vld [vmem:[#allocation4 + $0x8] sm:$0xff]
    %v47 = vld [vmem:[#allocation4 + $0x10] sm:$0xff]
    %v48 = vld [vmem:[#allocation4 + $0x18] sm:$0xff]
    %v49 = vld [vmem:[#allocation4 + $0x20] sm:$0xff]
    %v50 = vld [vmem:[#allocation4 + $0x28] sm:$0xff]
    %v51 = vld [vmem:[#allocation4 + $0x30] sm:$0xff]
    %v52 = vld [vmem:[#allocation4 + $0x38] sm:$0xff]
    %v53 = vld [vmem:[#allocation4 + $0x40] sm:$0xff]
    %v54 = vld [vmem:[#allocation4 + $0x48] sm:$0xff]
    %v55 = vld [vmem:[#allocation4 + $0x50] sm:$0xff]
    %v56 = vld [vmem:[#allocation4 + $0x58] sm:$0xff]
    %v57 = vld [vmem:[#allocation4 + $0x60] sm:$0xff]
    %v58 = vld [vmem:[#allocation4 + $0x68] sm:$0xff]
    %v59 = vld [vmem:[#allocation4 + $0x70] sm:$0xff]
    %v60 = vld [vmem:[#allocation4 + $0x78] sm:$0xff]
    %v61 = vld [vmem:[%s2] sm:$0x1]
    %v63 = vperm.slane %v61, 0
    %65 = vmatpush.msra.mxu0 %v60
    %66 = vmatpush.msra.mxu0 %v59
    %67 = vmatpush.msra.mxu0 %v58
    %68 = vmatpush.msra.mxu0 %v57
    %69 = vmatpush.msra.mxu0 %v56
    %70 = vmatpush.msra.mxu0 %v55
    %71 = vmatpush.msra.mxu0 %v54
    %72 = vmatpush.msra.mxu0 %v53
    %73 = vmatpush.msra.mxu0 %v52
    %74 = vmatpush.msra.mxu0 %v51
    %75 = vmatpush.msra.mxu0 %v50
    %76 = vmatpush.msra.mxu0 %v49
    %77 = vmatpush.msra.mxu0 %v48
    %78 = vmatpush.msra.mxu0 %v47
    %79 = vmatpush.msra.mxu0 %v46
    %80 = vmatpush.msra.mxu0 %v45
    %81 = vmatmul.f32.gmra.mxu0 %v44
    %v82 = vpop.f32.mrf.mxu0
    %v83 = vadd.f32 %v63, %v82
    %84 = vdwg.mxu0
    %85 = vst [vmem:[%s3] sm:$0xff] %v83
    // Predicated region
    $region22: #{bert_classifier_head.1} parent=1 // pred_check
      _
    $region23: #{bert_classifier_head.1} parent=1 // pred_check_branch
      %87 = sbr.rel (0) target = $region25
    $region24: #{bert_classifier_head.1} parent=1 // pred_region
      _
    $region25: #{bert_classifier_head.1} parent=1 // pred_fallthru
      _
    // Predicated region
    $region26: #{bert_classifier_head.1} parent=1 // pred_check
      _
    $region27: #{bert_classifier_head.1} parent=1 // pred_check_branch
      %89 = sbr.rel (0) target = $region29
    $region28: #{bert_classifier_head.1} parent=1 // pred_region
      _
    $region29: #{bert_classifier_head.1} parent=1 // pred_fallthru
      _
    %90 = vsyncpa [#allocation3], 1
    %91 = vsyncpa [#allocation5], 1

</llo_original>
